<compile_context>
chip_gen: v7x
topology: tpu7x:2x2x1
jax: 0.10.0
libtpu: 0.0.40
codegen_flags: <defaults>
</compile_context>

<pallas_src>
import functools

import jax
import jax.numpy as jnp
import numpy as np
from jax.experimental import pallas as pl
from jax.experimental.pallas import tpu as pltpu


def _round_up(a, m):
    return (a + m - 1) // m * m


# -----------------------------------------------------------------------------
# Pallas kernel: fused (gaussian | energy) MLP chain + Gaussian NLL on a tile
# of TN points belonging to a single (phi-sample, batch) pair.
# -----------------------------------------------------------------------------
def _decoder_kernel(xy_ref, zb_ref, w1x_ref, w1y_ref, w2_ref, b2_ref,
                    w3_ref, b3_ref, w4_ref, b4_ref, out_ref,
                    *, hid_dim, matmul_dtype):
    H = hid_dim
    use_cast = jnp.dtype(matmul_dtype) != jnp.dtype(jnp.float32)

    xy = xy_ref[...][0]            # [2, TN]   row 0 = x, row 1 = y
    x_row = xy[0:1, :]             # [1, TN]
    y_row = xy[1:2, :]             # [1, TN]
    zb = zb_ref[...][0, 0]         # [2H, 1]   W1z @ z + b1 for this (s, b)

    def mm(w_ref, h):
        w = w_ref[...]
        if use_cast:
            w = w.astype(matmul_dtype)
            h = h.astype(matmul_dtype)
        return jnp.dot(w, h, preferred_element_type=jnp.float32)

    def split_act(h):
        # rows [0, H)  : gaussian branch -> ReLU (VPU)
        # rows [H, 2H) : energy branch   -> SiLU (EUP only on this half)
        g = jnp.maximum(h[:H, :], 0.0)
        e = h[H:, :]
        e = e * jax.nn.sigmoid(e)
        return jnp.concatenate([g, e], axis=0)

    # Fused first layer: x / y enter as lane-broadcast outer products (VPU);
    # the z-dependent term arrives precomputed as a per-(s,b) bias column.
    h = split_act(w1x_ref[...] * x_row + w1y_ref[...] * y_row + zb)   # [2H, TN]
    h = split_act(mm(w2_ref, h) + b2_ref[...])                        # [2H, TN]
    h = split_act(mm(w3_ref, h) + b3_ref[...])                        # [2H, TN]
    o = mm(w4_ref, h) + b4_ref[...]                                   # [3, TN]

    mu = o[0:1, :]
    log_sigma = o[1:2, :]
    e_xy = o[2:3, :]
    # 0.5 * ((y - mu) * exp(-log_sigma))^2 + log_sigma   (no VALU divide)
    nll = 0.5 * jnp.square((y_row - mu) * jnp.exp(-log_sigma)) + log_sigma

    # Packed lane-dense output: rows = [mu, log_sigma, e_xy, nll].
    # (PyTorch's `nll.detach()*0.0 + e_xy` is identically e_xy in the forward.)
    out_ref[...] = jnp.concatenate([mu, log_sigma, e_xy, nll], axis=0)[None, None]


# -----------------------------------------------------------------------------
# Parameter construction (PyTorch nn.Linear convention: W [out, in], b [out]).
# -----------------------------------------------------------------------------
def init_linear(key, in_dim, out_dim):
    kw, kb = jax.random.split(key)
    bound = 1.0 / np.sqrt(in_dim)
    w = jax.random.uniform(kw, (out_dim, in_dim), jnp.float32, -bound, bound)
    b = jax.random.uniform(kb, (out_dim,), jnp.float32, -bound, bound)
    return w, b


def init_params(key, latent_dim, hid_dim):
    keys = jax.random.split(key, 8)
    wg1, bg1 = init_linear(keys[0], 1 + latent_dim, hid_dim)   # gaussian MLP
    wg2, bg2 = init_linear(keys[1], hid_dim, hid_dim)
    wg3, bg3 = init_linear(keys[2], hid_dim, hid_dim)
    wg4, bg4 = init_linear(keys[3], hid_dim, 2)
    we1, be1 = init_linear(keys[4], 2 + latent_dim, hid_dim)   # energy MLP
    we2, be2 = init_linear(keys[5], hid_dim, hid_dim)
    we3, be3 = init_linear(keys[6], hid_dim, hid_dim)
    we4, be4 = init_linear(keys[7], hid_dim, 1)
    return (wg1, bg1, wg2, bg2, wg3, bg3, wg4, bg4,
            we1, be1, we2, be2, we3, be3, we4, be4)


def pack_fused_params(params, hid_dim, latent_dim):
    """Fuse the gaussian / energy MLPs into one block-diagonal weight chain."""
    (wg1, bg1, wg2, bg2, wg3, bg3, wg4, bg4,
     we1, be1, we2, be2, we3, be3, we4, be4) = params
    H, L = hid_dim, latent_dim

    # first layer, split by feature: [x | z | y]; the gaussian half ignores y
    w1x = jnp.concatenate([wg1[:, 0:1], we1[:, 0:1]], axis=0)           # [2H, 1]
    w1z = jnp.concatenate([wg1[:, 1:1 + L], we1[:, 1:1 + L]], axis=0)   # [2H, L]
    w1y = jnp.concatenate([jnp.zeros((H, 1), jnp.float32),
                           we1[:, 1 + L:2 + L]], axis=0)                # [2H, 1]
    b1f = jnp.concatenate([bg1, be1], axis=0)[:, None]                  # [2H, 1]

    def blockdiag(a, b):
        top = jnp.concatenate([a, jnp.zeros_like(a)], axis=1)
        bot = jnp.concatenate([jnp.zeros_like(b), b], axis=1)
        return jnp.concatenate([top, bot], axis=0)

    w2f = blockdiag(wg2, we2)
    b2f = jnp.concatenate([bg2, be2], axis=0)[:, None]                  # [2H, 1]
    w3f = blockdiag(wg3, we3)
    b3f = jnp.concatenate([bg3, be3], axis=0)[:, None]                  # [2H, 1]
    w4f = jnp.concatenate(
        [jnp.concatenate([wg4, jnp.zeros((2, H), jnp.float32)], axis=1),
         jnp.concatenate([jnp.zeros((1, H), jnp.float32), we4], axis=1)],
        axis=0)                                                         # [3, 2H]
    b4f = jnp.concatenate([bg4, be4], axis=0)[:, None]                  # [3, 1]
    return w1x, w1y, w1z, b1f, w2f, b2f, w3f, b3f, w4f, b4f


# -----------------------------------------------------------------------------
# Wrapper: in-kernel feature assembly (no [M, 2+L] HBM slab), lane-tiled grid.
# -----------------------------------------------------------------------------
def gaussian_decoder_forward(x, y, phi, params, *, hid_dim, latent_dim,
                             tile_n=2048, matmul_dtype=jnp.float32):
    """
    x:   [B, N, 1] f32,  y: [B, N, 1] f32,  phi: [S, B, L] f32
    returns (e_xy [S,B,N,1], nll_xy [S,B,N,1], y_pred [S,B,N,2])
    """
    S = phi.shape[0]
    B, N, _ = x.shape
    H, L = hid_dim, latent_dim
    assert H % 8 == 0, "hid_dim must be a multiple of 8 for the fused layout"

    (w1x, w1y, w1z, b1f, w2f, b2f, w3f, b3f, w4f, b4f) = pack_fused_params(
        params, H, L)

    # Per-(s,b) z contribution of the fused first layer, bias folded in.
    # Tiny [S*B, L] x [L, 2H] matmul done once in XLA (factor-N less work than
    # redoing it per point inside the kernel, and removes all z HBM traffic).
    zb = jnp.einsum("sbl,hl->sbh", phi, w1z) + b1f[:, 0]    # [S, B, 2H]
    zb = zb[..., None].astype(jnp.float32)                  # [S, B, 2H, 1]

    # Lane-dense x/y slab: [B, 2, N_pad]  (no S broadcast, no z columns).
    TN = _round_up(min(tile_n, _round_up(N, 128)), 128)
    N_pad = _round_up(N, TN)
    xy = jnp.stack([x[..., 0], y[..., 0]], axis=1)          # [B, 2, N]
    xy = jnp.pad(xy, ((0, 0), (0, 0), (0, N_pad - N)))

    fused = (w1x, w1y, w2f, b2f, w3f, b3f, w4f, b4f)

    def full_spec(a):
        return pl.BlockSpec(a.shape, lambda s, b, j, _nd=a.ndim: (0,) * _nd)

    grid = (S, B, N_pad // TN)
    out = pl.pallas_call(
        functools.partial(_decoder_kernel, hid_dim=H, matmul_dtype=matmul_dtype),
        out_shape=jax.ShapeDtypeStruct((S, B, 4, N_pad), jnp.float32),
        grid_spec=pltpu.PrefetchScalarGridSpec(
            num_scalar_prefetch=0,
            grid=grid,
            in_specs=[pl.BlockSpec((1, 2, TN), lambda s, b, j: (b, 0, j)),
                      pl.BlockSpec((1, 1, 2 * H, 1), lambda s, b, j: (s, b, 0, 0))]
                     + [full_spec(p) for p in fused],
            out_specs=pl.BlockSpec((1, 1, 4, TN), lambda s, b, j: (s, b, 0, j)),
        ),
        compiler_params=pltpu.CompilerParams(
            dimension_semantics=("parallel", "parallel", "parallel")),
    )(xy, zb, *fused)

    out = out[..., :N]                                  # drop N padding
    y_pred = jnp.moveaxis(out[:, :, 0:2, :], 2, 3)      # [S, B, N, 2]
    e_xy = out[:, :, 2, :][..., None]                   # [S, B, N, 1]
    nll_xy = out[:, :, 3, :][..., None]                 # [S, B, N, 1]
    return e_xy, nll_xy, y_pred


# -----------------------------------------------------------------------------
# Pure-JAX reference (mirrors the PyTorch forward) for correctness checking.
# -----------------------------------------------------------------------------
def reference_forward(x, y, phi, params, *, latent_dim):
    (wg1, bg1, wg2, bg2, wg3, bg3, wg4, bg4,
     we1, be1, we2, be2, we3, be3, we4, be4) = params
    S = phi.shape[0]
    B, N, _ = x.shape
    x_e = jnp.broadcast_to(x[None], (S, B, N, 1))
    y_e = jnp.broadcast_to(y[None], (S, B, N, 1))
    z_e = jnp.broadcast_to(phi[:, :, None, :], (S, B, N, latent_dim))
    xz = jnp.concatenate([x_e, z_e], axis=-1)

    lin = lambda v, w, b: v @ w.T + b
    relu = lambda v: jnp.maximum(v, 0.0)
    silu = lambda v: v * jax.nn.sigmoid(v)

    h = relu(lin(xz, wg1, bg1))
    h = relu(lin(h, wg2, bg2))
    h = relu(lin(h, wg3, bg3))
    y_pred = lin(h, wg4, bg4)

    xzy = jnp.concatenate([xz, y_e], axis=-1)
    e = silu(lin(xzy, we1, be1))
    e = silu(lin(e, we2, be2))
    e = silu(lin(e, we3, be3))
    e_xy = lin(e, we4, be4)

    nll = 0.5 * jnp.square((y_e - y_pred[..., 0:1]) /
                           jnp.exp(y_pred[..., 1:2])) + y_pred[..., 1:2]
    return e_xy, nll, y_pred


if __name__ == "__main__":
    # TODO(synk): forward only — a custom_vjp / hand-written backward would be
    # needed to train through this pallas_call.
    HID_DIM = 32
    LATENT_DIM = 4
    S, B, N = 2, 2, 8          # num_phi_samples, batch, num_points

    key = jax.random.PRNGKey(0)
    kp, kx, ky, kphi = jax.random.split(key, 4)

    params = init_params(kp, LATENT_DIM, HID_DIM)
    x = jax.random.normal(kx, (B, N, 1), jnp.float32)
    y = jax.random.normal(ky, (B, N, 1), jnp.float32)
    phi = jax.random.normal(kphi, (S, B, LATENT_DIM), jnp.float32)

    fwd = jax.jit(functools.partial(
        gaussian_decoder_forward, hid_dim=HID_DIM, latent_dim=LATENT_DIM))
    e_xy, nll_xy, y_pred = fwd(x, y, phi, params)
    jax.block_until_ready((e_xy, nll_xy, y_pred))

    e_ref, nll_ref, yp_ref = reference_forward(
        x, y, phi, params, latent_dim=LATENT_DIM)
    np.testing.assert_allclose(np.asarray(e_xy), np.asarray(e_ref),
                               rtol=1e-4, atol=1e-5)
    np.testing.assert_allclose(np.asarray(nll_xy), np.asarray(nll_ref),
                               rtol=1e-4, atol=1e-5)
    np.testing.assert_allclose(np.asarray(y_pred), np.asarray(yp_ref),
                               rtol=1e-4, atol=1e-5)

    print("KERNEL_OK")
</pallas_src>

<mosaic_0001>
module attributes {stable_mosaic.version = 11 : i64} {
  func.func @_decoder_kernel(%arg0: i32, %arg1: i32, %arg2: i32, %arg3: memref<1x2x128xf32, #tpu.memory_space<vmem>>, %arg4: memref<1x1x64x1xf32, #tpu.memory_space<vmem>>, %arg5: memref<64x1xf32, #tpu.memory_space<vmem>>, %arg6: memref<64x1xf32, #tpu.memory_space<vmem>>, %arg7: memref<64x64xf32, #tpu.memory_space<vmem>>, %arg8: memref<64x1xf32, #tpu.memory_space<vmem>>, %arg9: memref<64x64xf32, #tpu.memory_space<vmem>>, %arg10: memref<64x1xf32, #tpu.memory_space<vmem>>, %arg11: memref<3x64xf32, #tpu.memory_space<vmem>>, %arg12: memref<3x1xf32, #tpu.memory_space<vmem>>, %arg13: memref<1x1x4x128xf32, #tpu.memory_space<vmem>>) attributes {dimension_semantics = [#tpu.dimension_semantics<parallel>, #tpu.dimension_semantics<parallel>, #tpu.dimension_semantics<parallel>], iteration_bounds = array<i64: 2, 2, 1>, scalar_prefetch = 0 : i64, scratch_operands = 0 : i64, tpu.core_type = #tpu.core_type<tc>, window_params = [{transform_indices = @transform_0, window_bounds = array<i64: 1, 2, 128>}, {transform_indices = @transform_1, window_bounds = array<i64: 1, 1, 64, 1>}, {pipeline_mode = #tpu.pipeline_mode<synchronous>, transform_indices = @transform_2, window_bounds = array<i64: 64, 1>}, {pipeline_mode = #tpu.pipeline_mode<synchronous>, transform_indices = @transform_3, window_bounds = array<i64: 64, 1>}, {pipeline_mode = #tpu.pipeline_mode<synchronous>, transform_indices = @transform_4, window_bounds = array<i64: 64, 64>}, {pipeline_mode = #tpu.pipeline_mode<synchronous>, transform_indices = @transform_5, window_bounds = array<i64: 64, 1>}, {pipeline_mode = #tpu.pipeline_mode<synchronous>, transform_indices = @transform_6, window_bounds = array<i64: 64, 64>}, {pipeline_mode = #tpu.pipeline_mode<synchronous>, transform_indices = @transform_7, window_bounds = array<i64: 64, 1>}, {pipeline_mode = #tpu.pipeline_mode<synchronous>, transform_indices = @transform_8, window_bounds = array<i64: 3, 64>}, {pipeline_mode = #tpu.pipeline_mode<synchronous>, transform_indices = @transform_9, window_bounds = array<i64: 3, 1>}, {transform_indices = @transform_10, window_bounds = array<i64: 1, 1, 4, 128>}]} {
    %c0 = arith.constant 0 : index
    %c0_0 = arith.constant 0 : index
    %c0_1 = arith.constant 0 : index
    %0 = vector.load %arg3[%c0, %c0_0, %c0_1] : memref<1x2x128xf32, #tpu.memory_space<vmem>>, vector<1x2x128xf32>
    %1 = vector.shape_cast %0 : vector<1x2x128xf32> to vector<2x128xf32>
    %2 = vector.extract_strided_slice %1 {offsets = [0, 0], sizes = [1, 128], strides = [1, 1]} : vector<2x128xf32> to vector<1x128xf32>
    %3 = vector.extract_strided_slice %1 {offsets = [1, 0], sizes = [1, 128], strides = [1, 1]} : vector<2x128xf32> to vector<1x128xf32>
    %c0_2 = arith.constant 0 : index
    %c0_3 = arith.constant 0 : index
    %c0_4 = arith.constant 0 : index
    %c0_5 = arith.constant 0 : index
    %4 = vector.load %arg4[%c0_2, %c0_3, %c0_4, %c0_5] : memref<1x1x64x1xf32, #tpu.memory_space<vmem>>, vector<1x1x64x1xf32>
    %5 = vector.shape_cast %4 : vector<1x1x64x1xf32> to vector<64x1xf32>
    %c0_6 = arith.constant 0 : index
    %c0_7 = arith.constant 0 : index
    %6 = vector.load %arg5[%c0_6, %c0_7] : memref<64x1xf32, #tpu.memory_space<vmem>>, vector<64x1xf32>
    %7 = vector.broadcast %6 : vector<64x1xf32> to vector<64x128xf32>
    %8 = vector.broadcast %2 : vector<1x128xf32> to vector<64x128xf32>
    %9 = arith.mulf %7, %8 : vector<64x128xf32>
    %c0_8 = arith.constant 0 : index
    %c0_9 = arith.constant 0 : index
    %10 = vector.load %arg6[%c0_8, %c0_9] : memref<64x1xf32, #tpu.memory_space<vmem>>, vector<64x1xf32>
    %11 = vector.broadcast %10 : vector<64x1xf32> to vector<64x128xf32>
    %12 = vector.broadcast %3 : vector<1x128xf32> to vector<64x128xf32>
    %13 = arith.mulf %11, %12 : vector<64x128xf32>
    %14 = arith.addf %9, %13 : vector<64x128xf32>
    %15 = vector.broadcast %5 : vector<64x1xf32> to vector<64x128xf32>
    %16 = arith.addf %14, %15 : vector<64x128xf32>
    %17 = vector.extract_strided_slice %16 {offsets = [0, 0], sizes = [32, 128], strides = [1, 1]} : vector<64x128xf32> to vector<32x128xf32>
    %cst = arith.constant 0.000000e+00 : f32
    %18 = vector.broadcast %cst : f32 to vector<32x128xf32>
    %19 = arith.maximumf %17, %18 : vector<32x128xf32>
    %20 = vector.extract_strided_slice %16 {offsets = [32, 0], sizes = [32, 128], strides = [1, 1]} : vector<64x128xf32> to vector<32x128xf32>
    %21 = arith.negf %20 : vector<32x128xf32>
    %22 = math.exp %21 : vector<32x128xf32>
    %cst_10 = arith.constant 1.000000e+00 : f32
    %23 = vector.broadcast %cst_10 : f32 to vector<32x128xf32>
    %24 = arith.addf %23, %22 : vector<32x128xf32>
    %25 = arith.divf %23, %24 : vector<32x128xf32>
    %26 = arith.mulf %20, %25 : vector<32x128xf32>
    %27 = tpu.concatenate %19, %26 in 0 : vector<32x128xf32>, vector<32x128xf32> -> vector<64x128xf32>
    %c0_11 = arith.constant 0 : index
    %c0_12 = arith.constant 0 : index
    %28 = vector.load %arg7[%c0_11, %c0_12] : memref<64x64xf32, #tpu.memory_space<vmem>>, vector<64x64xf32>
    %cst_13 = arith.constant dense<0.000000e+00> : vector<64x128xf32>
    %29 = tpu.matmul %28, %27, %cst_13 {dimension_numbers = #tpu.dot_dimension_numbers<[1], [0], [0], [1], [0, 0, 1, 1], [], []>} : vector<64x64xf32>, vector<64x128xf32>, vector<64x128xf32> -> vector<64x128xf32>
    %c0_14 = arith.constant 0 : index
    %c0_15 = arith.constant 0 : index
    %30 = vector.load %arg8[%c0_14, %c0_15] : memref<64x1xf32, #tpu.memory_space<vmem>>, vector<64x1xf32>
    %31 = vector.broadcast %30 : vector<64x1xf32> to vector<64x128xf32>
    %32 = arith.addf %29, %31 : vector<64x128xf32>
    %33 = vector.extract_strided_slice %32 {offsets = [0, 0], sizes = [32, 128], strides = [1, 1]} : vector<64x128xf32> to vector<32x128xf32>
    %cst_16 = arith.constant 0.000000e+00 : f32
    %34 = vector.broadcast %cst_16 : f32 to vector<32x128xf32>
    %35 = arith.maximumf %33, %34 : vector<32x128xf32>
    %36 = vector.extract_strided_slice %32 {offsets = [32, 0], sizes = [32, 128], strides = [1, 1]} : vector<64x128xf32> to vector<32x128xf32>
    %37 = arith.negf %36 : vector<32x128xf32>
    %38 = math.exp %37 : vector<32x128xf32>
    %cst_17 = arith.constant 1.000000e+00 : f32
    %39 = vector.broadcast %cst_17 : f32 to vector<32x128xf32>
    %40 = arith.addf %39, %38 : vector<32x128xf32>
    %41 = arith.divf %39, %40 : vector<32x128xf32>
    %42 = arith.mulf %36, %41 : vector<32x128xf32>
    %43 = tpu.concatenate %35, %42 in 0 : vector<32x128xf32>, vector<32x128xf32> -> vector<64x128xf32>
    %c0_18 = arith.constant 0 : index
    %c0_19 = arith.constant 0 : index
    %44 = vector.load %arg9[%c0_18, %c0_19] : memref<64x64xf32, #tpu.memory_space<vmem>>, vector<64x64xf32>
    %cst_20 = arith.constant dense<0.000000e+00> : vector<64x128xf32>
    %45 = tpu.matmul %44, %43, %cst_20 {dimension_numbers = #tpu.dot_dimension_numbers<[1], [0], [0], [1], [0, 0, 1, 1], [], []>} : vector<64x64xf32>, vector<64x128xf32>, vector<64x128xf32> -> vector<64x128xf32>
    %c0_21 = arith.constant 0 : index
    %c0_22 = arith.constant 0 : index
    %46 = vector.load %arg10[%c0_21, %c0_22] : memref<64x1xf32, #tpu.memory_space<vmem>>, vector<64x1xf32>
    %47 = vector.broadcast %46 : vector<64x1xf32> to vector<64x128xf32>
    %48 = arith.addf %45, %47 : vector<64x128xf32>
    %49 = vector.extract_strided_slice %48 {offsets = [0, 0], sizes = [32, 128], strides = [1, 1]} : vector<64x128xf32> to vector<32x128xf32>
    %cst_23 = arith.constant 0.000000e+00 : f32
    %50 = vector.broadcast %cst_23 : f32 to vector<32x128xf32>
    %51 = arith.maximumf %49, %50 : vector<32x128xf32>
    %52 = vector.extract_strided_slice %48 {offsets = [32, 0], sizes = [32, 128], strides = [1, 1]} : vector<64x128xf32> to vector<32x128xf32>
    %53 = arith.negf %52 : vector<32x128xf32>
    %54 = math.exp %53 : vector<32x128xf32>
    %cst_24 = arith.constant 1.000000e+00 : f32
    %55 = vector.broadcast %cst_24 : f32 to vector<32x128xf32>
    %56 = arith.addf %55, %54 : vector<32x128xf32>
    %57 = arith.divf %55, %56 : vector<32x128xf32>
    %58 = arith.mulf %52, %57 : vector<32x128xf32>
    %59 = tpu.concatenate %51, %58 in 0 : vector<32x128xf32>, vector<32x128xf32> -> vector<64x128xf32>
    %c0_25 = arith.constant 0 : index
    %c0_26 = arith.constant 0 : index
    %60 = vector.load %arg11[%c0_25, %c0_26] : memref<3x64xf32, #tpu.memory_space<vmem>>, vector<3x64xf32>
    %cst_27 = arith.constant dense<0.000000e+00> : vector<3x128xf32>
    %61 = tpu.matmul %60, %59, %cst_27 {dimension_numbers = #tpu.dot_dimension_numbers<[1], [0], [0], [1], [0, 0, 1, 1], [], []>} : vector<3x64xf32>, vector<64x128xf32>, vector<3x128xf32> -> vector<3x128xf32>
    %c0_28 = arith.constant 0 : index
    %c0_29 = arith.constant 0 : index
    %62 = vector.load %arg12[%c0_28, %c0_29] : memref<3x1xf32, #tpu.memory_space<vmem>>, vector<3x1xf32>
    %63 = vector.broadcast %62 : vector<3x1xf32> to vector<3x128xf32>
    %64 = arith.addf %61, %63 : vector<3x128xf32>
    %65 = vector.extract_strided_slice %64 {offsets = [0, 0], sizes = [1, 128], strides = [1, 1]} : vector<3x128xf32> to vector<1x128xf32>
    %66 = vector.extract_strided_slice %64 {offsets = [1, 0], sizes = [1, 128], strides = [1, 1]} : vector<3x128xf32> to vector<1x128xf32>
    %67 = vector.extract_strided_slice %64 {offsets = [2, 0], sizes = [1, 128], strides = [1, 1]} : vector<3x128xf32> to vector<1x128xf32>
    %68 = arith.subf %3, %65 : vector<1x128xf32>
    %cst_30 = arith.constant 0.000000e+00 : f32
    %69 = vector.broadcast %cst_30 : f32 to vector<1x128xf32>
    %70 = arith.subf %69, %66 : vector<1x128xf32>
    %71 = math.exp %70 : vector<1x128xf32>
    %72 = arith.mulf %68, %71 : vector<1x128xf32>
    %73 = arith.mulf %72, %72 : vector<1x128xf32>
    %cst_31 = arith.constant 5.000000e-01 : f32
    %74 = vector.broadcast %cst_31 : f32 to vector<1x128xf32>
    %75 = arith.mulf %74, %73 : vector<1x128xf32>
    %76 = arith.addf %75, %66 : vector<1x128xf32>
    %77 = tpu.concatenate %65, %66, %67, %76 in 0 : vector<1x128xf32>, vector<1x128xf32>, vector<1x128xf32>, vector<1x128xf32> -> vector<4x128xf32>
    %78 = vector.shape_cast %77 : vector<4x128xf32> to vector<1x1x4x128xf32>
    %c0_32 = arith.constant 0 : index
    %c0_33 = arith.constant 0 : index
    %c0_34 = arith.constant 0 : index
    %c0_35 = arith.constant 0 : index
    %79 = vector.load %arg13[%c0_32, %c0_33, %c0_34, %c0_35] : memref<1x1x4x128xf32, #tpu.memory_space<vmem>>, vector<1x1x4x128xf32>
    tpu.vector_store %arg13[%c0_32, %c0_33, %c0_34, %c0_35], %78 {strides = array<i32>} : memref<1x1x4x128xf32, #tpu.memory_space<vmem>>, vector<1x1x4x128xf32>,
    return
  }
  func.func @transform_0(%arg0: i32, %arg1: i32, %arg2: i32) -> (i32, i32, i32) {
    %c0_i32 = arith.constant 0 : i32
    %c0_i32_0 = arith.constant 0 : i32
    return %arg1, %c0_i32, %arg2 : i32, i32, i32
  }
  func.func @transform_1(%arg0: i32, %arg1: i32, %arg2: i32) -> (i32, i32, i32, i32) {
    %c0_i32 = arith.constant 0 : i32
    %c0_i32_0 = arith.constant 0 : i32
    %c0_i32_1 = arith.constant 0 : i32
    return %arg0, %arg1, %c0_i32, %c0_i32_0 : i32, i32, i32, i32
  }
  func.func @transform_2(%arg0: i32, %arg1: i32, %arg2: i32) -> (i32, i32) {
    %c0_i32 = arith.constant 0 : i32
    %c0_i32_0 = arith.constant 0 : i32
    %c0_i32_1 = arith.constant 0 : i32
    return %c0_i32, %c0_i32_0 : i32, i32
  }
  func.func @transform_3(%arg0: i32, %arg1: i32, %arg2: i32) -> (i32, i32) {
    %c0_i32 = arith.constant 0 : i32
    %c0_i32_0 = arith.constant 0 : i32
    %c0_i32_1 = arith.constant 0 : i32
    return %c0_i32, %c0_i32_0 : i32, i32
  }
  func.func @transform_4(%arg0: i32, %arg1: i32, %arg2: i32) -> (i32, i32) {
    %c0_i32 = arith.constant 0 : i32
    %c0_i32_0 = arith.constant 0 : i32
    %c0_i32_1 = arith.constant 0 : i32
    return %c0_i32, %c0_i32_0 : i32, i32
  }
  func.func @transform_5(%arg0: i32, %arg1: i32, %arg2: i32) -> (i32, i32) {
    %c0_i32 = arith.constant 0 : i32
    %c0_i32_0 = arith.constant 0 : i32
    %c0_i32_1 = arith.constant 0 : i32
    return %c0_i32, %c0_i32_0 : i32, i32
  }
  func.func @transform_6(%arg0: i32, %arg1: i32, %arg2: i32) -> (i32, i32) {
    %c0_i32 = arith.constant 0 : i32
    %c0_i32_0 = arith.constant 0 : i32
    %c0_i32_1 = arith.constant 0 : i32
    return %c0_i32, %c0_i32_0 : i32, i32
  }
  func.func @transform_7(%arg0: i32, %arg1: i32, %arg2: i32) -> (i32, i32) {
    %c0_i32 = arith.constant 0 : i32
    %c0_i32_0 = arith.constant 0 : i32
    %c0_i32_1 = arith.constant 0 : i32
    return %c0_i32, %c0_i32_0 : i32, i32
  }
  func.func @transform_8(%arg0: i32, %arg1: i32, %arg2: i32) -> (i32, i32) {
    %c0_i32 = arith.constant 0 : i32
    %c0_i32_0 = arith.constant 0 : i32
    %c0_i32_1 = arith.constant 0 : i32
    return %c0_i32, %c0_i32_0 : i32, i32
  }
  func.func @transform_9(%arg0: i32, %arg1: i32, %arg2: i32) -> (i32, i32) {
    %c0_i32 = arith.constant 0 : i32
    %c0_i32_0 = arith.constant 0 : i32
    %c0_i32_1 = arith.constant 0 : i32
    return %c0_i32, %c0_i32_0 : i32, i32
  }
  func.func @transform_10(%arg0: i32, %arg1: i32, %arg2: i32) -> (i32, i32, i32, i32) {
    %c0_i32 = arith.constant 0 : i32
    %c0_i32_0 = arith.constant 0 : i32
    return %arg0, %arg1, %c0_i32, %arg2 : i32, i32, i32, i32
  }
}

</mosaic_0001>

<llo_original>
// kernel: gaussian_decoder_forward.1
$region0: #{gaussian_decoder_forward.1}
  #allocation0 [shape = 'u32[]', space=smem, size = 0x4, offset = 0x4, fixed_abs, tag = 'smem constant byte address 0x4 - core index']
  #allocation1 [shape = 'u32[144,128]{1,0:T(1,128)}', space=vmem, size = 0x12000, scoped, tag = 'internal scratch']
  %s0 = inlined_call_operand.vmem [shape: f32[2,2,128], index: 0, kind: input, shape index: {}]
  %s1 = inlined_call_operand.vmem [shape: f32[2,2,64,1], index: 1, kind: input, shape index: {}]
  %s2 = inlined_call_operand.vmem [shape: f32[64,1], index: 2, kind: input, shape index: {}]
  %s3 = inlined_call_operand.vmem [shape: f32[64,1], index: 3, kind: input, shape index: {}]
  %s4 = inlined_call_operand.vmem [shape: f32[64,64], index: 4, kind: input, shape index: {}]
  %s5 = inlined_call_operand.vmem [shape: f32[64,1], index: 5, kind: input, shape index: {}]
  %s6 = inlined_call_operand.vmem [shape: f32[64,64], index: 6, kind: input, shape index: {}]
  %s7 = inlined_call_operand.vmem [shape: f32[64,1], index: 7, kind: input, shape index: {}]
  %s8 = inlined_call_operand.vmem [shape: f32[3,64], index: 8, kind: input, shape index: {}]
  %s9 = inlined_call_operand.vmem [shape: f32[3,1], index: 9, kind: input, shape index: {}]
  %s10 = inlined_call_operand.vmem [shape: f32[2,2,4,128], index: 10, kind: output, shape index: {}]
  %s11 = sld [smem:[#allocation0]]
  $region73: #{gaussian_decoder_forward.1} parent=0
    _
  %s13 = ssub.s32 1, %s11
  %s14 = scalar_select 0, %s13, %s11
  loop: start=0, step=1, limit=6
  $region2: #{gaussian_decoder_forward.1} parent=0 // loop_pre_header
    _
  $region3: #{gaussian_decoder_forward.1} parent=0 // loop_header
    %s16 = sphi 0, %s20
    %p17 = scmp.ge.s32.totalorder %s16, 6
    %s23 = sphi 0, %s42
    %s24 = sphi 0, %s38
    %s25 = sphi 0, %s34
    %s26 = sphi 0, %s23
    %s27 = sphi 0, %s24
    %s28 = sphi 0, %s25
    %s29 = sphi 0, %s26
    %s30 = sphi 0, %s27
    %s31 = sphi 0, %s28
    %s47 = sphi 0, %s49
    %s50 = sphi 0, %s47
    %s51 = sphi 0, %s50
    %s67 = sphi 0, %s51
    %s75 = sphi 0, %s77
    %s78 = sphi 0, %s75
    %s79 = sphi 0, %s78
    %s95 = sphi 0, %s79
    %s99 = sphi 0, %s99
    %s101 = sphi 0, %s99
    %s102 = sphi 0, %s101
    %s116 = sphi 0, %s102
    %s120 = sphi 0, %s120
    %s122 = sphi 0, %s120
    %s123 = sphi 0, %s122
    %s137 = sphi 0, %s123
    %s141 = sphi 0, %s141
    %s143 = sphi 0, %s141
    %s144 = sphi 0, %s143
    %s158 = sphi 0, %s144
    %s162 = sphi 0, %s162
    %s164 = sphi 0, %s162
    %s165 = sphi 0, %s164
    %s179 = sphi 0, %s165
    %s183 = sphi 0, %s183
    %s185 = sphi 0, %s183
    %s186 = sphi 0, %s185
    %s200 = sphi 0, %s186
    %s204 = sphi 0, %s204
    %s206 = sphi 0, %s204
    %s207 = sphi 0, %s206
    %s221 = sphi 0, %s207
    %s225 = sphi 0, %s225
    %s227 = sphi 0, %s225
    %s228 = sphi 0, %s227
    %s242 = sphi 0, %s228
    %s246 = sphi 0, %s246
    %s248 = sphi 0, %s246
    %s249 = sphi 0, %s248
    %s263 = sphi 0, %s249
    %s273 = sphi 0, %s275
    %s276 = sphi 0, %s273
    %s277 = sphi 0, %s276
    %s293 = sphi 0, %s277
  $region4: #{gaussian_decoder_forward.1} parent=0 // loop_header_branch
    %19 = sbr.rel (%p17) target = $region8
  $region5: #{gaussian_decoder_forward.1} parent=0 // loop_body
    %s21 = ssub.s32 %s16, 1
    %s22 = ssub.s32 %s16, 2
    %s32 = sadd.s32 1, %s25
    %p33 = scmp.ge.s32.totalorder %s32, 1
    %s34 = scalar_select %p33, 0, %s32
    %s35 = sadd.s32 1, %s24
    %s36 = scalar_select %p33, %s35, %s24
    %p37 = scmp.ge.s32.totalorder %s36, 2
    %s38 = scalar_select %p37, 0, %s36
    %s39 = sadd.s32 1, %s23
    %s40 = scalar_select %p37, %s39, %s23
    %p41 = scmp.ge.s32.totalorder %s40, 2
    %s42 = scalar_select %p41, 0, %s40
    %s43 = ssub.s32 %s24, %s38
    %s44 = ssub.s32 %s25, %s34
    %s45 = sor.u32 %s43, %s44
    %p46 = scmp.eq.s32.totalorder %s45, 0
    %s48 = sadd.s32 %s47, 1
    %s49 = scalar_select %p46, %s47, %s48
    %p52 = pneg %p46
    %p53 = scmp.eq.s32.totalorder %s16, 3
    %p54 = por %p52, %p53
    %p55 = scmp.ne.s32.totalorder %s47, %s50
    %p56 = scmp.eq.s32.totalorder %s16, 0
    %p57 = por %p55, %p56
    %p58 = scmp.ne.s32.totalorder %s47, %s50
    %p59 = scmp.eq.s32.totalorder %s21, 3
    %p60 = por %p58, %p59
    %p61 = scmp.ne.s32.totalorder %s50, %s51
    %p62 = scmp.eq.s32.totalorder %s21, 0
    %p63 = por %p61, %p62
    %p64 = scmp.ne.s32.totalorder %s50, %s51
    %p65 = scmp.eq.s32.totalorder %s22, 3
    %p66 = por %p64, %p65
    %p68 = scmp.ne.s32.totalorder %s51, %s67
    %p69 = scmp.eq.s32.totalorder %s22, 0
    %p70 = por %p68, %p69
    %s71 = ssub.s32 %s23, %s42
    %s72 = ssub.s32 %s24, %s38
    %s73 = sor.u32 %s71, %s72
    %p74 = scmp.eq.s32.totalorder %s73, 0
    %s76 = sadd.s32 %s75, 1
    %s77 = scalar_select %p74, %s75, %s76
    %p80 = pneg %p74
    %p81 = scmp.eq.s32.totalorder %s16, 3
    %p82 = por %p80, %p81
    %p83 = scmp.ne.s32.totalorder %s75, %s78
    %p84 = scmp.eq.s32.totalorder %s16, 0
    %p85 = por %p83, %p84
    %p86 = scmp.ne.s32.totalorder %s75, %s78
    %p87 = scmp.eq.s32.totalorder %s21, 3
    %p88 = por %p86, %p87
    %p89 = scmp.ne.s32.totalorder %s78, %s79
    %p90 = scmp.eq.s32.totalorder %s21, 0
    %p91 = por %p89, %p90
    %p92 = scmp.ne.s32.totalorder %s78, %s79
    %p93 = scmp.eq.s32.totalorder %s22, 3
    %p94 = por %p92, %p93
    %p96 = scmp.ne.s32.totalorder %s79, %s95
    %p97 = scmp.eq.s32.totalorder %s22, 0
    %p98 = por %p96, %p97
    %s100 = sadd.s32 %s99, 1
    %p103 = scmp.eq.s32.totalorder %s16, 3
    %p104 = scmp.ne.s32.totalorder %s99, %s101
    %p105 = scmp.eq.s32.totalorder %s16, 0
    %p106 = por %p104, %p105
    %p107 = scmp.ne.s32.totalorder %s99, %s101
    %p108 = scmp.eq.s32.totalorder %s21, 3
    %p109 = por %p107, %p108
    %p110 = scmp.ne.s32.totalorder %s101, %s102
    %p111 = scmp.eq.s32.totalorder %s21, 0
    %p112 = por %p110, %p111
    %p113 = scmp.ne.s32.totalorder %s101, %s102
    %p114 = scmp.eq.s32.totalorder %s22, 3
    %p115 = por %p113, %p114
    %p117 = scmp.ne.s32.totalorder %s102, %s116
    %p118 = scmp.eq.s32.totalorder %s22, 0
    %p119 = por %p117, %p118
    %s121 = sadd.s32 %s120, 1
    %p124 = scmp.eq.s32.totalorder %s16, 3
    %p125 = scmp.ne.s32.totalorder %s120, %s122
    %p126 = scmp.eq.s32.totalorder %s16, 0
    %p127 = por %p125, %p126
    %p128 = scmp.ne.s32.totalorder %s120, %s122
    %p129 = scmp.eq.s32.totalorder %s21, 3
    %p130 = por %p128, %p129
    %p131 = scmp.ne.s32.totalorder %s122, %s123
    %p132 = scmp.eq.s32.totalorder %s21, 0
    %p133 = por %p131, %p132
    %p134 = scmp.ne.s32.totalorder %s122, %s123
    %p135 = scmp.eq.s32.totalorder %s22, 3
    %p136 = por %p134, %p135
    %p138 = scmp.ne.s32.totalorder %s123, %s137
    %p139 = scmp.eq.s32.totalorder %s22, 0
    %p140 = por %p138, %p139
    %s142 = sadd.s32 %s141, 1
    %p145 = scmp.eq.s32.totalorder %s16, 3
    %p146 = scmp.ne.s32.totalorder %s141, %s143
    %p147 = scmp.eq.s32.totalorder %s16, 0
    %p148 = por %p146, %p147
    %p149 = scmp.ne.s32.totalorder %s141, %s143
    %p150 = scmp.eq.s32.totalorder %s21, 3
    %p151 = por %p149, %p150
    %p152 = scmp.ne.s32.totalorder %s143, %s144
    %p153 = scmp.eq.s32.totalorder %s21, 0
    %p154 = por %p152, %p153
    %p155 = scmp.ne.s32.totalorder %s143, %s144
    %p156 = scmp.eq.s32.totalorder %s22, 3
    %p157 = por %p155, %p156
    %p159 = scmp.ne.s32.totalorder %s144, %s158
    %p160 = scmp.eq.s32.totalorder %s22, 0
    %p161 = por %p159, %p160
    %s163 = sadd.s32 %s162, 1
    %p166 = scmp.eq.s32.totalorder %s16, 3
    %p167 = scmp.ne.s32.totalorder %s162, %s164
    %p168 = scmp.eq.s32.totalorder %s16, 0
    %p169 = por %p167, %p168
    %p170 = scmp.ne.s32.totalorder %s162, %s164
    %p171 = scmp.eq.s32.totalorder %s21, 3
    %p172 = por %p170, %p171
    %p173 = scmp.ne.s32.totalorder %s164, %s165
    %p174 = scmp.eq.s32.totalorder %s21, 0
    %p175 = por %p173, %p174
    %p176 = scmp.ne.s32.totalorder %s164, %s165
    %p177 = scmp.eq.s32.totalorder %s22, 3
    %p178 = por %p176, %p177
    %p180 = scmp.ne.s32.totalorder %s165, %s179
    %p181 = scmp.eq.s32.totalorder %s22, 0
    %p182 = por %p180, %p181
    %s184 = sadd.s32 %s183, 1
    %p187 = scmp.eq.s32.totalorder %s16, 3
    %p188 = scmp.ne.s32.totalorder %s183, %s185
    %p189 = scmp.eq.s32.totalorder %s16, 0
    %p190 = por %p188, %p189
    %p191 = scmp.ne.s32.totalorder %s183, %s185
    %p192 = scmp.eq.s32.totalorder %s21, 3
    %p193 = por %p191, %p192
    %p194 = scmp.ne.s32.totalorder %s185, %s186
    %p195 = scmp.eq.s32.totalorder %s21, 0
    %p196 = por %p194, %p195
    %p197 = scmp.ne.s32.totalorder %s185, %s186
    %p198 = scmp.eq.s32.totalorder %s22, 3
    %p199 = por %p197, %p198
    %p201 = scmp.ne.s32.totalorder %s186, %s200
    %p202 = scmp.eq.s32.totalorder %s22, 0
    %p203 = por %p201, %p202
    %s205 = sadd.s32 %s204, 1
    %p208 = scmp.eq.s32.totalorder %s16, 3
    %p209 = scmp.ne.s32.totalorder %s204, %s206
    %p210 = scmp.eq.s32.totalorder %s16, 0
    %p211 = por %p209, %p210
    %p212 = scmp.ne.s32.totalorder %s204, %s206
    %p213 = scmp.eq.s32.totalorder %s21, 3
    %p214 = por %p212, %p213
    %p215 = scmp.ne.s32.totalorder %s206, %s207
    %p216 = scmp.eq.s32.totalorder %s21, 0
    %p217 = por %p215, %p216
    %p218 = scmp.ne.s32.totalorder %s206, %s207
    %p219 = scmp.eq.s32.totalorder %s22, 3
    %p220 = por %p218, %p219
    %p222 = scmp.ne.s32.totalorder %s207, %s221
    %p223 = scmp.eq.s32.totalorder %s22, 0
    %p224 = por %p222, %p223
    %s226 = sadd.s32 %s225, 1
    %p229 = scmp.eq.s32.totalorder %s16, 3
    %p230 = scmp.ne.s32.totalorder %s225, %s227
    %p231 = scmp.eq.s32.totalorder %s16, 0
    %p232 = por %p230, %p231
    %p233 = scmp.ne.s32.totalorder %s225, %s227
    %p234 = scmp.eq.s32.totalorder %s21, 3
    %p235 = por %p233, %p234
    %p236 = scmp.ne.s32.totalorder %s227, %s228
    %p237 = scmp.eq.s32.totalorder %s21, 0
    %p238 = por %p236, %p237
    %p239 = scmp.ne.s32.totalorder %s227, %s228
    %p240 = scmp.eq.s32.totalorder %s22, 3
    %p241 = por %p239, %p240
    %p243 = scmp.ne.s32.totalorder %s228, %s242
    %p244 = scmp.eq.s32.totalorder %s22, 0
    %p245 = por %p243, %p244
    %s247 = sadd.s32 %s246, 1
    %p250 = scmp.eq.s32.totalorder %s16, 3
    %p251 = scmp.ne.s32.totalorder %s246, %s248
    %p252 = scmp.eq.s32.totalorder %s16, 0
    %p253 = por %p251, %p252
    %p254 = scmp.ne.s32.totalorder %s246, %s248
    %p255 = scmp.eq.s32.totalorder %s21, 3
    %p256 = por %p254, %p255
    %p257 = scmp.ne.s32.totalorder %s248, %s249
    %p258 = scmp.eq.s32.totalorder %s21, 0
    %p259 = por %p257, %p258
    %p260 = scmp.ne.s32.totalorder %s248, %s249
    %p261 = scmp.eq.s32.totalorder %s22, 3
    %p262 = por %p260, %p261
    %p264 = scmp.ne.s32.totalorder %s249, %s263
    %p265 = scmp.eq.s32.totalorder %s22, 0
    %p266 = por %p264, %p265
    %s267 = ssub.s32 %s23, %s42
    %s268 = ssub.s32 %s24, %s38
    %s269 = sor.u32 %s267, %s268
    %s270 = ssub.s32 %s25, %s34
    %s271 = sor.u32 %s269, %s270
    %p272 = scmp.eq.s32.totalorder %s271, 0
    %s274 = sadd.s32 %s273, 1
    %s275 = scalar_select %p272, %s273, %s274
    %p278 = pneg %p272
    %p279 = scmp.eq.s32.totalorder %s16, 3
    %p280 = por %p278, %p279
    %p281 = scmp.ne.s32.totalorder %s273, %s276
    %p282 = scmp.eq.s32.totalorder %s16, 0
    %p283 = por %p281, %p282
    %p284 = scmp.ne.s32.totalorder %s273, %s276
    %p285 = scmp.eq.s32.totalorder %s21, 3
    %p286 = por %p284, %p285
    %p287 = scmp.ne.s32.totalorder %s276, %s277
    %p288 = scmp.eq.s32.totalorder %s21, 0
    %p289 = por %p287, %p288
    %p290 = scmp.ne.s32.totalorder %s276, %s277
    %p291 = scmp.eq.s32.totalorder %s22, 3
    %p292 = por %p290, %p291
    %p294 = scmp.ne.s32.totalorder %s277, %s293
    %p295 = scmp.eq.s32.totalorder %s22, 0
    %p296 = por %p294, %p295
    %p297 = scmp.le.s32.totalorder 1, %s16
    %p298 = scmp.lt.s32.totalorder %s16, 5
    %p299 = pnand %p297, %p298
    %p300 = pneg %p299
    // Predicated region
    $region9: #{gaussian_decoder_forward.1} parent=5 // pred_check
      _
    $region10: #{gaussian_decoder_forward.1} parent=5 // pred_check_branch
      %302 = sbr.rel (%p299) target = $region12
    $region11: #{gaussian_decoder_forward.1} parent=5 // pred_region
      %s303 = ssub.s32 %s16, 1
      // Predicated region
      $region13: #{gaussian_decoder_forward.1} parent=11 // pred_check
        %p304 = pneg %p112
      $region14: #{gaussian_decoder_forward.1} parent=11 // pred_check_branch
        %306 = sbr.rel (%p304) target = $region16
      $region15: #{gaussian_decoder_forward.1} parent=11 // pred_region
        _
      $region16: #{gaussian_decoder_forward.1} parent=11 // pred_fallthru
        _
      // Predicated region
      $region17: #{gaussian_decoder_forward.1} parent=11 // pred_check
        %p307 = pneg %p133
      $region18: #{gaussian_decoder_forward.1} parent=11 // pred_check_branch
        %309 = sbr.rel (%p307) target = $region20
      $region19: #{gaussian_decoder_forward.1} parent=11 // pred_region
        _
      $region20: #{gaussian_decoder_forward.1} parent=11 // pred_fallthru
        _
      // Predicated region
      $region21: #{gaussian_decoder_forward.1} parent=11 // pred_check
        %p310 = pneg %p154
      $region22: #{gaussian_decoder_forward.1} parent=11 // pred_check_branch
        %312 = sbr.rel (%p310) target = $region24
      $region23: #{gaussian_decoder_forward.1} parent=11 // pred_region
        _
      $region24: #{gaussian_decoder_forward.1} parent=11 // pred_fallthru
        _
      // Predicated region
      $region25: #{gaussian_decoder_forward.1} parent=11 // pred_check
        %p313 = pneg %p175
      $region26: #{gaussian_decoder_forward.1} parent=11 // pred_check_branch
        %315 = sbr.rel (%p313) target = $region28
      $region27: #{gaussian_decoder_forward.1} parent=11 // pred_region
        _
      $region28: #{gaussian_decoder_forward.1} parent=11 // pred_fallthru
        _
      // Predicated region
      $region29: #{gaussian_decoder_forward.1} parent=11 // pred_check
        %p316 = pneg %p196
      $region30: #{gaussian_decoder_forward.1} parent=11 // pred_check_branch
        %318 = sbr.rel (%p316) target = $region32
      $region31: #{gaussian_decoder_forward.1} parent=11 // pred_region
        _
      $region32: #{gaussian_decoder_forward.1} parent=11 // pred_fallthru
        _
      // Predicated region
      $region33: #{gaussian_decoder_forward.1} parent=11 // pred_check
        %p319 = pneg %p217
      $region34: #{gaussian_decoder_forward.1} parent=11 // pred_check_branch
        %321 = sbr.rel (%p319) target = $region36
      $region35: #{gaussian_decoder_forward.1} parent=11 // pred_region
        _
      $region36: #{gaussian_decoder_forward.1} parent=11 // pred_fallthru
        _
      // Predicated region
      $region37: #{gaussian_decoder_forward.1} parent=11 // pred_check
        %p322 = pneg %p238
      $region38: #{gaussian_decoder_forward.1} parent=11 // pred_check_branch
        %324 = sbr.rel (%p322) target = $region40
      $region39: #{gaussian_decoder_forward.1} parent=11 // pred_region
        _
      $region40: #{gaussian_decoder_forward.1} parent=11 // pred_fallthru
        _
      // Predicated region
      $region41: #{gaussian_decoder_forward.1} parent=11 // pred_check
        %p325 = pneg %p259
      $region42: #{gaussian_decoder_forward.1} parent=11 // pred_check_branch
        %327 = sbr.rel (%p325) target = $region44
      $region43: #{gaussian_decoder_forward.1} parent=11 // pred_region
        _
      $region44: #{gaussian_decoder_forward.1} parent=11 // pred_fallthru
        _
    $region12: #{gaussian_decoder_forward.1} parent=5 // pred_fallthru
      _
    %p328 = scmp.lt.s32.totalorder %s16, 4
    // Predicated region
    $region45: #{gaussian_decoder_forward.1} parent=5 // pred_check
      %p329 = pneg %p328
    $region46: #{gaussian_decoder_forward.1} parent=5 // pred_check_branch
      %331 = sbr.rel (%p329) target = $region48
    $region47: #{gaussian_decoder_forward.1} parent=5 // pred_region
      // Predicated region
      $region49: #{gaussian_decoder_forward.1} parent=47 // pred_check
        %p332 = pneg %p57
      $region50: #{gaussian_decoder_forward.1} parent=47 // pred_check_branch
        %334 = sbr.rel (%p332) target = $region52
      $region51: #{gaussian_decoder_forward.1} parent=47 // pred_region
        %p335 = scmp.lt.s32.totalorder %s24, 1
        %s336 = scalar_select %p335, %s24, 1
        %p337 = scmp.lt.s32.totalorder %s25, 0
        %s338 = scalar_select %p337, %s25, 0
        %s339 = sadd.s32 %s338, %s336
        %s340 = smul.addr %s339, 2
        %s341 = scalar_lea.vmem %s0, %s340
      $region52: #{gaussian_decoder_forward.1} parent=47 // pred_fallthru
        _
      // Predicated region
      $region53: #{gaussian_decoder_forward.1} parent=47 // pred_check
        %p342 = pneg %p85
      $region54: #{gaussian_decoder_forward.1} parent=47 // pred_check_branch
        %344 = sbr.rel (%p342) target = $region56
      $region55: #{gaussian_decoder_forward.1} parent=47 // pred_region
        %p345 = scmp.lt.s32.totalorder %s23, 1
        %s346 = scalar_select %p345, %s23, 1
        %p347 = scmp.lt.s32.totalorder %s24, 1
        %s348 = scalar_select %p347, %s24, 1
        %s349 = smul.addr %s348, 8
        %s350 = smul.addr %s346, 16
        %s351 = sadd.s32 %s349, %s350
        %s352 = smul.addr %s351, 8
        %s353 = scalar_lea.vmem %s1, %s352
      $region56: #{gaussian_decoder_forward.1} parent=47 // pred_fallthru
        _
    $region48: #{gaussian_decoder_forward.1} parent=5 // pred_fallthru
      _
    %p354 = scmp.le.s32.totalorder 1, %s16
    %p355 = scmp.lt.s32.totalorder %s16, 5
    %p356 = pnand %p354, %p355
    %p357 = pneg %p356
    // Predicated region
    $region57: #{gaussian_decoder_forward.1} parent=5 // pred_check
      _
    $region58: #{gaussian_decoder_forward.1} parent=5 // pred_check_branch
      %359 = sbr.rel (%p356) target = $region60
    $region59: #{gaussian_decoder_forward.1} parent=5 // pred_region
      %s360 = ssub.s32 %s16, 1
      %p361 = scmp.lt.s32.totalorder %s27, 1
      %s362 = scalar_select %p361, %s27, 1
      %p363 = scmp.lt.s32.totalorder %s28, 0
      %s364 = scalar_select %p363, %s28, 0
      %s365 = sadd.s32 %s364, %s362
      %s366 = smul.addr %s365, 2
      %s367 = scalar_lea.vmem %s0, %s366
      %p368 = pneg %p63
      %p369 = pneg %p60
      %p370 = scmp.lt.s32.totalorder %s26, 1
      %s371 = scalar_select %p370, %s26, 1
      %p372 = scmp.lt.s32.totalorder %s27, 1
      %s373 = scalar_select %p372, %s27, 1
      %s374 = smul.addr %s373, 8
      %s375 = smul.addr %s371, 16
      %s376 = sadd.s32 %s374, %s375
      %s377 = smul.addr %s376, 8
      %s378 = scalar_lea.vmem %s1, %s377
      %p379 = pneg %p91
      %p380 = pneg %p88
      %p381 = pneg %p112
      %p382 = pneg %p109
      %p383 = pneg %p133
      %p384 = pneg %p130
      %p385 = pneg %p154
      %p386 = pneg %p151
      %p387 = pneg %p175
      %p388 = pneg %p172
      %p389 = pneg %p196
      %p390 = pneg %p193
      %p391 = pneg %p217
      %p392 = pneg %p214
      %p393 = pneg %p238
      %p394 = pneg %p235
      %p395 = pneg %p259
      %p396 = pneg %p256
      %p397 = pneg %p289
      %p398 = pneg %p286
      %p399 = scmp.lt.s32.totalorder %s26, 1
      %s400 = scalar_select %p399, %s26, 1
      %p401 = scmp.lt.s32.totalorder %s27, 1
      %s402 = scalar_select %p401, %s27, 1
      %p403 = scmp.lt.s32.totalorder %s28, 0
      %s404 = scalar_select %p403, %s28, 0
      %s405 = sadd.s32 %s404, %s402
      %s406 = smul.addr %s400, 2
      %s407 = sadd.s32 %s405, %s406
      %s408 = smul.addr %s407, 4
      %s409 = scalar_lea.vmem %s10, %s408
      %p410 = scmp.lt.s32.totalorder %s27, 1
      %s411 = scalar_select %p410, %s27, 1
      %p412 = scmp.lt.s32.totalorder %s28, 0
      %s413 = scalar_select %p412, %s28, 0
      %s414 = sadd.s32 %s413, %s411
      %s415 = smul.addr %s414, 2
      %s416 = scalar_lea.vmem %s0, %s415
      %p417 = scmp.lt.s32.totalorder %s26, 1
      %s418 = scalar_select %p417, %s26, 1
      %p419 = scmp.lt.s32.totalorder %s27, 1
      %s420 = scalar_select %p419, %s27, 1
      %s421 = smul.addr %s420, 8
      %s422 = smul.addr %s418, 16
      %s423 = sadd.s32 %s421, %s422
      %s424 = smul.addr %s423, 8
      %s425 = scalar_lea.vmem %s1, %s424
      %p426 = scmp.lt.s32.totalorder %s26, 1
      %s427 = scalar_select %p426, %s26, 1
      %p428 = scmp.lt.s32.totalorder %s27, 1
      %s429 = scalar_select %p428, %s27, 1
      %p430 = scmp.lt.s32.totalorder %s28, 0
      %s431 = scalar_select %p430, %s28, 0
      %s432 = sadd.s32 %s431, %s429
      %s433 = smul.addr %s427, 2
      %s434 = sadd.s32 %s432, %s433
      %s435 = smul.addr %s434, 4
      %s436 = scalar_lea.vmem %s10, %s435
      %v437 = vld [vmem:[%s416] sm:$0x3]
      %v438 = vld [vmem:[%s425] sm:$0xff]
      %v439 = vld [vmem:[%s425 + $0x8] sm:$0xff]
      %v440 = vld [vmem:[%s425 + $0x10] sm:$0xff]
      %v441 = vld [vmem:[%s425 + $0x18] sm:$0xff]
      %v442 = vld [vmem:[%s425 + $0x20] sm:$0xff]
      %v443 = vld [vmem:[%s425 + $0x28] sm:$0xff]
      %v444 = vld [vmem:[%s425 + $0x30] sm:$0xff]
      %v445 = vld [vmem:[%s425 + $0x38] sm:$0xff]
      %v446 = vld [vmem:[%s2] sm:$0xff]
      %v447 = vld [vmem:[%s2 + $0x8] sm:$0xff]
      %v448 = vld [vmem:[%s2 + $0x10] sm:$0xff]
      %v449 = vld [vmem:[%s2 + $0x18] sm:$0xff]
      %v450 = vld [vmem:[%s2 + $0x20] sm:$0xff]
      %v451 = vld [vmem:[%s2 + $0x28] sm:$0xff]
      %v452 = vld [vmem:[%s2 + $0x30] sm:$0xff]
      %v453 = vld [vmem:[%s2 + $0x38] sm:$0xff]
      %455 = vset.pattern.permute.xlu0 0
      %456 = vperm.xlu0 %455, %v446
      %v457 = vpop.permute.xlu0 %456
      %460 = vset.pattern.permute.xlu0 0
      %461 = vperm.xlu0 %460, %v447
      %v462 = vpop.permute.xlu0 %461
      %465 = vset.pattern.permute.xlu0 0
      %466 = vperm.xlu0 %465, %v448
      %v467 = vpop.permute.xlu0 %466
      %470 = vset.pattern.permute.xlu0 0
      %471 = vperm.xlu0 %470, %v449
      %v472 = vpop.permute.xlu0 %471
      %475 = vset.pattern.permute.xlu0 0
      %476 = vperm.xlu0 %475, %v450
      %v477 = vpop.permute.xlu0 %476
      %480 = vset.pattern.permute.xlu0 0
      %481 = vperm.xlu0 %480, %v451
      %v482 = vpop.permute.xlu0 %481
      %485 = vset.pattern.permute.xlu0 0
      %486 = vperm.xlu0 %485, %v452
      %v487 = vpop.permute.xlu0 %486
      %490 = vset.pattern.permute.xlu0 0
      %491 = vperm.xlu0 %490, %v453
      %v492 = vpop.permute.xlu0 %491
      %v494 = vlaneseq
      %v495 = vshrl.u32 %v494, 7
      %v496 = vsub.s32 0, %v495
      %v497 = vrot.slane %v437, %v496
      %v498 = vmul.f32 %v457, %v497
      %v499 = vmul.f32 %v462, %v497
      %v500 = vmul.f32 %v467, %v497
      %v501 = vmul.f32 %v472, %v497
      %v502 = vmul.f32 %v477, %v497
      %v503 = vmul.f32 %v482, %v497
      %v504 = vmul.f32 %v487, %v497
      %v505 = vmul.f32 %v492, %v497
      %v506 = vld [vmem:[%s3] sm:$0xff]
      %v507 = vld [vmem:[%s3 + $0x8] sm:$0xff]
      %v508 = vld [vmem:[%s3 + $0x10] sm:$0xff]
      %v509 = vld [vmem:[%s3 + $0x18] sm:$0xff]
      %v510 = vld [vmem:[%s3 + $0x20] sm:$0xff]
      %v511 = vld [vmem:[%s3 + $0x28] sm:$0xff]
      %v512 = vld [vmem:[%s3 + $0x30] sm:$0xff]
      %v513 = vld [vmem:[%s3 + $0x38] sm:$0xff]
      %515 = vset.pattern.permute.xlu0 0
      %516 = vperm.xlu0 %515, %v506
      %v517 = vpop.permute.xlu0 %516
      %520 = vset.pattern.permute.xlu0 0
      %521 = vperm.xlu0 %520, %v507
      %v522 = vpop.permute.xlu0 %521
      %525 = vset.pattern.permute.xlu0 0
      %526 = vperm.xlu0 %525, %v508
      %v527 = vpop.permute.xlu0 %526
      %530 = vset.pattern.permute.xlu0 0
      %531 = vperm.xlu0 %530, %v509
      %v532 = vpop.permute.xlu0 %531
      %535 = vset.pattern.permute.xlu0 0
      %536 = vperm.xlu0 %535, %v510
      %v537 = vpop.permute.xlu0 %536
      %540 = vset.pattern.permute.xlu0 0
      %541 = vperm.xlu0 %540, %v511
      %v542 = vpop.permute.xlu0 %541
      %545 = vset.pattern.permute.xlu0 0
      %546 = vperm.xlu0 %545, %v512
      %v547 = vpop.permute.xlu0 %546
      %550 = vset.pattern.permute.xlu0 0
      %551 = vperm.xlu0 %550, %v513
      %v552 = vpop.permute.xlu0 %551
      %v554 = vlaneseq
      %v555 = vshrl.u32 %v554, 7
      %v556 = vsub.s32 1, %v555
      %v557 = vrot.slane %v437, %v556
      %v558 = vmul.f32 %v517, %v557
      %v559 = vmul.f32 %v522, %v557
      %v560 = vmul.f32 %v527, %v557
      %v561 = vmul.f32 %v532, %v557
      %v562 = vmul.f32 %v537, %v557
      %v563 = vmul.f32 %v542, %v557
      %v564 = vmul.f32 %v547, %v557
      %v565 = vmul.f32 %v552, %v557
      %v566 = vadd.f32 %v498, %v558
      %v567 = vadd.f32 %v499, %v559
      %v568 = vadd.f32 %v500, %v560
      %v569 = vadd.f32 %v501, %v561
      %v570 = vadd.f32 %v502, %v562
      %v571 = vadd.f32 %v503, %v563
      %v572 = vadd.f32 %v504, %v564
      %v573 = vadd.f32 %v505, %v565
      %575 = vset.pattern.permute.xlu0 0
      %576 = vperm.xlu0 %575, %v438
      %v577 = vpop.permute.xlu0 %576
      %580 = vset.pattern.permute.xlu0 0
      %581 = vperm.xlu0 %580, %v439
      %v582 = vpop.permute.xlu0 %581
      %585 = vset.pattern.permute.xlu0 0
      %586 = vperm.xlu0 %585, %v440
      %v587 = vpop.permute.xlu0 %586
      %590 = vset.pattern.permute.xlu0 0
      %591 = vperm.xlu0 %590, %v441
      %v592 = vpop.permute.xlu0 %591
      %595 = vset.pattern.permute.xlu0 0
      %596 = vperm.xlu0 %595, %v442
      %v597 = vpop.permute.xlu0 %596
      %600 = vset.pattern.permute.xlu0 0
      %601 = vperm.xlu0 %600, %v443
      %v602 = vpop.permute.xlu0 %601
      %605 = vset.pattern.permute.xlu0 0
      %606 = vperm.xlu0 %605, %v444
      %v607 = vpop.permute.xlu0 %606
      %610 = vset.pattern.permute.xlu0 0
      %611 = vperm.xlu0 %610, %v445
      %v612 = vpop.permute.xlu0 %611
      %v614 = vadd.f32 %v566, %v577
      %v615 = vadd.f32 %v567, %v582
      %v616 = vadd.f32 %v568, %v587
      %v617 = vadd.f32 %v569, %v592
      %v618 = vadd.f32 %v570, %v597
      %v619 = vadd.f32 %v571, %v602
      %v620 = vadd.f32 %v572, %v607
      %v621 = vadd.f32 %v573, %v612
      %v622 = vmax.f32 %v614, 0.0
      %v623 = vmax.f32 %v615, 0.0
      %v624 = vmax.f32 %v616, 0.0
      %v625 = vmax.f32 %v617, 0.0
      %v626 = vxor.u32 %v618, 2147483648
      %v627 = vxor.u32 %v619, 2147483648
      %v628 = vxor.u32 %v620, 2147483648
      %v629 = vxor.u32 %v621, 2147483648
      %v630 = vmul.f32 %v626, 1.442695
      %v631 = vpow.pop %v630
      %v632 = vmul.f32 %v627, 1.442695
      %v633 = vpow.pop %v632
      %v634 = vmul.f32 %v628, 1.442695
      %v635 = vpow.pop %v634
      %v636 = vmul.f32 %v629, 1.442695
      %v637 = vpow.pop %v636
      %v638 = vadd.f32 %v631, 1.0
      %v639 = vadd.f32 %v633, 1.0
      %v640 = vadd.f32 %v635, 1.0
      %v641 = vadd.f32 %v637, 1.0
      %v642 = vrcp.pop %v638
      %v643 = vmul.f32 1.0, %v642
      %v644 = vrcp.pop %v639
      %v645 = vmul.f32 1.0, %v644
      %v646 = vrcp.pop %v640
      %v647 = vmul.f32 1.0, %v646
      %v648 = vrcp.pop %v641
      %v649 = vmul.f32 1.0, %v648
      %v650 = vmul.f32 %v618, %v643
      %v651 = vmul.f32 %v619, %v645
      %v652 = vmul.f32 %v620, %v647
      %v653 = vmul.f32 %v621, %v649
      %v654 = vld [vmem:[%s4] sm:$0xff]
      %v655 = vld [vmem:[%s4 + $0x8] sm:$0xff]
      %v656 = vld [vmem:[%s4 + $0x10] sm:$0xff]
      %v657 = vld [vmem:[%s4 + $0x18] sm:$0xff]
      %v658 = vld [vmem:[%s4 + $0x20] sm:$0xff]
      %v659 = vld [vmem:[%s4 + $0x28] sm:$0xff]
      %v660 = vld [vmem:[%s4 + $0x30] sm:$0xff]
      %v661 = vld [vmem:[%s4 + $0x38] sm:$0xff]
      %v662 = vld [vmem:[%s5] sm:$0xff]
      %v663 = vld [vmem:[%s5 + $0x8] sm:$0xff]
      %v664 = vld [vmem:[%s5 + $0x10] sm:$0xff]
      %v665 = vld [vmem:[%s5 + $0x18] sm:$0xff]
      %v666 = vld [vmem:[%s5 + $0x20] sm:$0xff]
      %v667 = vld [vmem:[%s5 + $0x28] sm:$0xff]
      %v668 = vld [vmem:[%s5 + $0x30] sm:$0xff]
      %v669 = vld [vmem:[%s5 + $0x38] sm:$0xff]
      %671 = vset.pattern.permute.xlu0 0
      %672 = vperm.xlu0 %671, %v662
      %v673 = vpop.permute.xlu0 %672
      %676 = vset.pattern.permute.xlu0 0
      %677 = vperm.xlu0 %676, %v663
      %v678 = vpop.permute.xlu0 %677
      %681 = vset.pattern.permute.xlu0 0
      %682 = vperm.xlu0 %681, %v664
      %v683 = vpop.permute.xlu0 %682
      %686 = vset.pattern.permute.xlu0 0
      %687 = vperm.xlu0 %686, %v665
      %v688 = vpop.permute.xlu0 %687
      %691 = vset.pattern.permute.xlu0 0
      %692 = vperm.xlu0 %691, %v666
      %v693 = vpop.permute.xlu0 %692
      %696 = vset.pattern.permute.xlu0 0
      %697 = vperm.xlu0 %696, %v667
      %v698 = vpop.permute.xlu0 %697
      %701 = vset.pattern.permute.xlu0 0
      %702 = vperm.xlu0 %701, %v668
      %v703 = vpop.permute.xlu0 %702
      %706 = vset.pattern.permute.xlu0 0
      %707 = vperm.xlu0 %706, %v669
      %v708 = vpop.permute.xlu0 %707
      %vm710 = vcmask 523264
      %v712 = vsel %vm710, %v654, 0
      %v715 = vsel %vm710, %v655, 0
      %v718 = vsel %vm710, %v656, 0
      %v721 = vsel %vm710, %v657, 0
      %v724 = vsel %vm710, %v658, 0
      %v727 = vsel %vm710, %v659, 0
      %v730 = vsel %vm710, %v660, 0
      %v733 = vsel %vm710, %v661, 0
      %735 = vmatprep.subr.mxu0 0.0
      %736 = vmatpush1.msra.mxu0 %v622
      %737 = vmatprep.subr.mxu0 0.0
      %738 = vmatpush1.msra.mxu0 %v623
      %739 = vmatprep.subr.mxu0 0.0
      %740 = vmatpush1.msra.mxu0 %v624
      %741 = vmatprep.subr.mxu0 0.0
      %742 = vmatpush1.msra.mxu0 %v625
      %743 = vmatprep.subr.mxu0 0.0
      %744 = vmatpush1.msra.mxu0 %v650
      %745 = vmatprep.subr.mxu0 0.0
      %746 = vmatpush1.msra.mxu0 %v651
      %747 = vmatprep.subr.mxu0 0.0
      %748 = vmatpush1.msra.mxu0 %v652
      %749 = vmatprep.subr.mxu0 0.0
      %750 = vmatpush1.msra.mxu0 %v653
      %751 = vmatprep.subr.mxu0 0.0
      %752 = vmatpush1.msra.mxu0 0.0
      %753 = vmatprep.subr.mxu0 0.0
      %754 = vmatpush1.msra.mxu0 0.0
      %755 = vmatprep.subr.mxu0 0.0
      %756 = vmatpush1.msra.mxu0 0.0
      %757 = vmatprep.subr.mxu0 0.0
      %758 = vmatpush1.msra.mxu0 0.0
      %759 = vmatprep.subr.mxu0 0.0
      %760 = vmatpush1.msra.mxu0 0.0
      %761 = vmatprep.subr.mxu0 0.0
      %762 = vmatpush1.msra.mxu0 0.0
      %763 = vmatprep.subr.mxu0 0.0
      %764 = vmatpush1.msra.mxu0 0.0
      %765 = vmatprep.subr.mxu0 0.0
      %766 = vmatpush1.msra.mxu0 0.0
      %767 = vmatprep.subr.mxu0 0.0
      %768 = vmatpush1.msra.mxu0 0.0
      %769 = vmatprep.subr.mxu0 0.0
      %770 = vmatpush1.msra.mxu0 0.0
      %771 = vmatprep.subr.mxu0 0.0
      %772 = vmatpush1.msra.mxu0 0.0
      %773 = vmatprep.subr.mxu0 0.0
      %774 = vmatpush1.msra.mxu0 0.0
      %775 = vmatprep.subr.mxu0 0.0
      %776 = vmatpush1.msra.mxu0 0.0
      %777 = vmatprep.subr.mxu0 0.0
      %778 = vmatpush1.msra.mxu0 0.0
      %779 = vmatprep.subr.mxu0 0.0
      %780 = vmatpush1.msra.mxu0 0.0
      %781 = vmatprep.subr.mxu0 0.0
      %782 = vmatpush1.msra.mxu0 0.0
      %783 = vmatprep.subr.mxu0 0.0
      %784 = vmatpush1.msra.mxu0 0.0
      %785 = vmatprep.subr.mxu0 0.0
      %786 = vmatpush1.msra.mxu0 0.0
      %787 = vmatprep.subr.mxu0 0.0
      %788 = vmatpush1.msra.mxu0 0.0
      %789 = vmatprep.subr.mxu0 0.0
      %790 = vmatpush1.msra.mxu0 0.0
      %791 = vmatprep.subr.mxu0 0.0
      %792 = vmatpush1.msra.mxu0 0.0
      %793 = vmatprep.subr.mxu0 0.0
      %794 = vmatpush1.msra.mxu0 0.0
      %795 = vmatprep.subr.mxu0 0.0
      %796 = vmatpush1.msra.mxu0 0.0
      %797 = vmatprep.subr.mxu0 0.0
      %798 = vmatpush1.msra.mxu0 0.0
      %799 = vmatprep.mubr.f32.mxu0 0.0
      %800 = vmatmul.mubr.f32.gmra.mrb[0].mxu0 %v712
      %v801 = vpop.f32.mrb[0].mxu0
      %v802 = vadd.f32 %v673, %v801
      %v803 = vpop.f32.mrb[0].mxu0
      %804 = vmatprep.mubr.f32.mxu0 0.0
      %805 = vmatmul.mubr.f32.gmra.mrb[0].mxu0 %v715
      %v806 = vpop.f32.mrb[0].mxu0
      %v807 = vadd.f32 %v678, %v806
      %v808 = vpop.f32.mrb[0].mxu0
      %809 = vmatprep.mubr.f32.mxu0 0.0
      %810 = vmatmul.mubr.f32.gmra.mrb[0].mxu0 %v718
      %v811 = vpop.f32.mrb[0].mxu0
      %v812 = vadd.f32 %v683, %v811
      %v813 = vpop.f32.mrb[0].mxu0
      %814 = vmatprep.mubr.f32.mxu0 0.0
      %815 = vmatmul.mubr.f32.gmra.mrb[0].mxu0 %v721
      %v816 = vpop.f32.mrb[0].mxu0
      %v817 = vadd.f32 %v688, %v816
      %v818 = vpop.f32.mrb[0].mxu0
      %819 = vmatprep.mubr.f32.mxu0 0.0
      %820 = vmatmul.mubr.f32.gmra.mrb[0].mxu0 %v724
      %v821 = vpop.f32.mrb[0].mxu0
      %v822 = vadd.f32 %v693, %v821
      %v823 = vpop.f32.mrb[0].mxu0
      %824 = vmatprep.mubr.f32.mxu0 0.0
      %825 = vmatmul.mubr.f32.gmra.mrb[0].mxu0 %v727
      %v826 = vpop.f32.mrb[0].mxu0
      %v827 = vadd.f32 %v698, %v826
      %v828 = vpop.f32.mrb[0].mxu0
      %829 = vmatprep.mubr.f32.mxu0 0.0
      %830 = vmatmul.mubr.f32.gmra.mrb[0].mxu0 %v730
      %v831 = vpop.f32.mrb[0].mxu0
      %v832 = vadd.f32 %v703, %v831
      %v833 = vpop.f32.mrb[0].mxu0
      %834 = vmatprep.mubr.f32.mxu0 0.0
      %835 = vmatmul.mubr.f32.gmra.mrb[0].mxu0 %v733
      %v836 = vpop.f32.mrb[0].mxu0
      %v837 = vadd.f32 %v708, %v836
      %v838 = vpop.f32.mrb[0].mxu0
      %839 = vdwg.mxu0
      %v840 = vmax.f32 %v802, 0.0
      %v841 = vmax.f32 %v807, 0.0
      %v842 = vmax.f32 %v812, 0.0
      %v843 = vmax.f32 %v817, 0.0
      %v844 = vxor.u32 %v822, 2147483648
      %v845 = vxor.u32 %v827, 2147483648
      %v846 = vxor.u32 %v832, 2147483648
      %v847 = vxor.u32 %v837, 2147483648
      %v848 = vmul.f32 %v844, 1.442695
      %v849 = vpow.pop %v848
      %v850 = vmul.f32 %v845, 1.442695
      %v851 = vpow.pop %v850
      %v852 = vmul.f32 %v846, 1.442695
      %v853 = vpow.pop %v852
      %v854 = vmul.f32 %v847, 1.442695
      %v855 = vpow.pop %v854
      %v856 = vadd.f32 %v849, 1.0
      %v857 = vadd.f32 %v851, 1.0
      %v858 = vadd.f32 %v853, 1.0
      %v859 = vadd.f32 %v855, 1.0
      %v860 = vrcp.pop %v856
      %v861 = vmul.f32 1.0, %v860
      %v862 = vrcp.pop %v857
      %v863 = vmul.f32 1.0, %v862
      %v864 = vrcp.pop %v858
      %v865 = vmul.f32 1.0, %v864
      %v866 = vrcp.pop %v859
      %v867 = vmul.f32 1.0, %v866
      %v868 = vmul.f32 %v822, %v861
      %v869 = vmul.f32 %v827, %v863
      %v870 = vmul.f32 %v832, %v865
      %v871 = vmul.f32 %v837, %v867
      %v872 = vld [vmem:[%s6] sm:$0xff]
      %v873 = vld [vmem:[%s6 + $0x8] sm:$0xff]
      %v874 = vld [vmem:[%s6 + $0x10] sm:$0xff]
      %v875 = vld [vmem:[%s6 + $0x18] sm:$0xff]
      %v876 = vld [vmem:[%s6 + $0x20] sm:$0xff]
      %v877 = vld [vmem:[%s6 + $0x28] sm:$0xff]
      %v878 = vld [vmem:[%s6 + $0x30] sm:$0xff]
      %v879 = vld [vmem:[%s6 + $0x38] sm:$0xff]
      %v880 = vld [vmem:[%s7] sm:$0xff]
      %v881 = vld [vmem:[%s7 + $0x8] sm:$0xff]
      %v882 = vld [vmem:[%s7 + $0x10] sm:$0xff]
      %v883 = vld [vmem:[%s7 + $0x18] sm:$0xff]
      %v884 = vld [vmem:[%s7 + $0x20] sm:$0xff]
      %v885 = vld [vmem:[%s7 + $0x28] sm:$0xff]
      %v886 = vld [vmem:[%s7 + $0x30] sm:$0xff]
      %v887 = vld [vmem:[%s7 + $0x38] sm:$0xff]
      %889 = vset.pattern.permute.xlu0 0
      %890 = vperm.xlu0 %889, %v880
      %v891 = vpop.permute.xlu0 %890
      %894 = vset.pattern.permute.xlu0 0
      %895 = vperm.xlu0 %894, %v881
      %v896 = vpop.permute.xlu0 %895
      %899 = vset.pattern.permute.xlu0 0
      %900 = vperm.xlu0 %899, %v882
      %v901 = vpop.permute.xlu0 %900
      %904 = vset.pattern.permute.xlu0 0
      %905 = vperm.xlu0 %904, %v883
      %v906 = vpop.permute.xlu0 %905
      %909 = vset.pattern.permute.xlu0 0
      %910 = vperm.xlu0 %909, %v884
      %v911 = vpop.permute.xlu0 %910
      %914 = vset.pattern.permute.xlu0 0
      %915 = vperm.xlu0 %914, %v885
      %v916 = vpop.permute.xlu0 %915
      %919 = vset.pattern.permute.xlu0 0
      %920 = vperm.xlu0 %919, %v886
      %v921 = vpop.permute.xlu0 %920
      %924 = vset.pattern.permute.xlu0 0
      %925 = vperm.xlu0 %924, %v887
      %v926 = vpop.permute.xlu0 %925
      %v929 = vsel %vm710, %v872, 0
      %v932 = vsel %vm710, %v873, 0
      %v935 = vsel %vm710, %v874, 0
      %v938 = vsel %vm710, %v875, 0
      %v941 = vsel %vm710, %v876, 0
      %v944 = vsel %vm710, %v877, 0
      %v947 = vsel %vm710, %v878, 0
      %v950 = vsel %vm710, %v879, 0
      %952 = vmatprep.subr.mxu0 0.0
      %953 = vmatpush1.msra.mxu0 %v840
      %954 = vmatprep.subr.mxu0 0.0
      %955 = vmatpush1.msra.mxu0 %v841
      %956 = vmatprep.subr.mxu0 0.0
      %957 = vmatpush1.msra.mxu0 %v842
      %958 = vmatprep.subr.mxu0 0.0
      %959 = vmatpush1.msra.mxu0 %v843
      %960 = vmatprep.subr.mxu0 0.0
      %961 = vmatpush1.msra.mxu0 %v868
      %962 = vmatprep.subr.mxu0 0.0
      %963 = vmatpush1.msra.mxu0 %v869
      %964 = vmatprep.subr.mxu0 0.0
      %965 = vmatpush1.msra.mxu0 %v870
      %966 = vmatprep.subr.mxu0 0.0
      %967 = vmatpush1.msra.mxu0 %v871
      %968 = vmatprep.subr.mxu0 0.0
      %969 = vmatpush1.msra.mxu0 0.0
      %970 = vmatprep.subr.mxu0 0.0
      %971 = vmatpush1.msra.mxu0 0.0
      %972 = vmatprep.subr.mxu0 0.0
      %973 = vmatpush1.msra.mxu0 0.0
      %974 = vmatprep.subr.mxu0 0.0
      %975 = vmatpush1.msra.mxu0 0.0
      %976 = vmatprep.subr.mxu0 0.0
      %977 = vmatpush1.msra.mxu0 0.0
      %978 = vmatprep.subr.mxu0 0.0
      %979 = vmatpush1.msra.mxu0 0.0
      %980 = vmatprep.subr.mxu0 0.0
      %981 = vmatpush1.msra.mxu0 0.0
      %982 = vmatprep.subr.mxu0 0.0
      %983 = vmatpush1.msra.mxu0 0.0
      %984 = vmatprep.subr.mxu0 0.0
      %985 = vmatpush1.msra.mxu0 0.0
      %986 = vmatprep.subr.mxu0 0.0
      %987 = vmatpush1.msra.mxu0 0.0
      %988 = vmatprep.subr.mxu0 0.0
      %989 = vmatpush1.msra.mxu0 0.0
      %990 = vmatprep.subr.mxu0 0.0
      %991 = vmatpush1.msra.mxu0 0.0
      %992 = vmatprep.subr.mxu0 0.0
      %993 = vmatpush1.msra.mxu0 0.0
      %994 = vmatprep.subr.mxu0 0.0
      %995 = vmatpush1.msra.mxu0 0.0
      %996 = vmatprep.subr.mxu0 0.0
      %997 = vmatpush1.msra.mxu0 0.0
      %998 = vmatprep.subr.mxu0 0.0
      %999 = vmatpush1.msra.mxu0 0.0
      %1000 = vmatprep.subr.mxu0 0.0
      %1001 = vmatpush1.msra.mxu0 0.0
      %1002 = vmatprep.subr.mxu0 0.0
      %1003 = vmatpush1.msra.mxu0 0.0
      %1004 = vmatprep.subr.mxu0 0.0
      %1005 = vmatpush1.msra.mxu0 0.0
      %1006 = vmatprep.subr.mxu0 0.0
      %1007 = vmatpush1.msra.mxu0 0.0
      %1008 = vmatprep.subr.mxu0 0.0
      %1009 = vmatpush1.msra.mxu0 0.0
      %1010 = vmatprep.subr.mxu0 0.0
      %1011 = vmatpush1.msra.mxu0 0.0
      %1012 = vmatprep.subr.mxu0 0.0
      %1013 = vmatpush1.msra.mxu0 0.0
      %1014 = vmatprep.subr.mxu0 0.0
      %1015 = vmatpush1.msra.mxu0 0.0
      %1016 = vmatprep.mubr.f32.mxu0 0.0
      %1017 = vmatmul.mubr.f32.gmra.mrb[0].mxu0 %v929
      %v1018 = vpop.f32.mrb[0].mxu0
      %v1019 = vadd.f32 %v891, %v1018
      %v1020 = vpop.f32.mrb[0].mxu0
      %1021 = vmatprep.mubr.f32.mxu0 0.0
      %1022 = vmatmul.mubr.f32.gmra.mrb[0].mxu0 %v932
      %v1023 = vpop.f32.mrb[0].mxu0
      %v1024 = vadd.f32 %v896, %v1023
      %v1025 = vpop.f32.mrb[0].mxu0
      %1026 = vmatprep.mubr.f32.mxu0 0.0
      %1027 = vmatmul.mubr.f32.gmra.mrb[0].mxu0 %v935
      %v1028 = vpop.f32.mrb[0].mxu0
      %v1029 = vadd.f32 %v901, %v1028
      %v1030 = vpop.f32.mrb[0].mxu0
      %1031 = vmatprep.mubr.f32.mxu0 0.0
      %1032 = vmatmul.mubr.f32.gmra.mrb[0].mxu0 %v938
      %v1033 = vpop.f32.mrb[0].mxu0
      %v1034 = vadd.f32 %v906, %v1033
      %v1035 = vpop.f32.mrb[0].mxu0
      %1036 = vmatprep.mubr.f32.mxu0 0.0
      %1037 = vmatmul.mubr.f32.gmra.mrb[0].mxu0 %v941
      %v1038 = vpop.f32.mrb[0].mxu0
      %v1039 = vadd.f32 %v911, %v1038
      %v1040 = vpop.f32.mrb[0].mxu0
      %1041 = vmatprep.mubr.f32.mxu0 0.0
      %1042 = vmatmul.mubr.f32.gmra.mrb[0].mxu0 %v944
      %v1043 = vpop.f32.mrb[0].mxu0
      %v1044 = vadd.f32 %v916, %v1043
      %v1045 = vpop.f32.mrb[0].mxu0
      %1046 = vmatprep.mubr.f32.mxu0 0.0
      %1047 = vmatmul.mubr.f32.gmra.mrb[0].mxu0 %v947
      %v1048 = vpop.f32.mrb[0].mxu0
      %v1049 = vadd.f32 %v921, %v1048
      %v1050 = vpop.f32.mrb[0].mxu0
      %1051 = vmatprep.mubr.f32.mxu0 0.0
      %1052 = vmatmul.mubr.f32.gmra.mrb[0].mxu0 %v950
      %v1053 = vpop.f32.mrb[0].mxu0
      %v1054 = vadd.f32 %v926, %v1053
      %v1055 = vpop.f32.mrb[0].mxu0
      %1056 = vdwg.mxu0
      %v1057 = vmax.f32 %v1019, 0.0
      %v1058 = vmax.f32 %v1024, 0.0
      %v1059 = vmax.f32 %v1029, 0.0
      %v1060 = vmax.f32 %v1034, 0.0
      %v1061 = vxor.u32 %v1039, 2147483648
      %v1062 = vxor.u32 %v1044, 2147483648
      %v1063 = vxor.u32 %v1049, 2147483648
      %v1064 = vxor.u32 %v1054, 2147483648
      %v1065 = vmul.f32 %v1061, 1.442695
      %v1066 = vpow.pop %v1065
      %v1067 = vmul.f32 %v1062, 1.442695
      %v1068 = vpow.pop %v1067
      %v1069 = vmul.f32 %v1063, 1.442695
      %v1070 = vpow.pop %v1069
      %v1071 = vmul.f32 %v1064, 1.442695
      %v1072 = vpow.pop %v1071
      %v1073 = vadd.f32 %v1066, 1.0
      %v1074 = vadd.f32 %v1068, 1.0
      %v1075 = vadd.f32 %v1070, 1.0
      %v1076 = vadd.f32 %v1072, 1.0
      %v1077 = vrcp.pop %v1073
      %v1078 = vmul.f32 1.0, %v1077
      %v1079 = vrcp.pop %v1074
      %v1080 = vmul.f32 1.0, %v1079
      %v1081 = vrcp.pop %v1075
      %v1082 = vmul.f32 1.0, %v1081
      %v1083 = vrcp.pop %v1076
      %v1084 = vmul.f32 1.0, %v1083
      %v1085 = vmul.f32 %v1039, %v1078
      %v1086 = vmul.f32 %v1044, %v1080
      %v1087 = vmul.f32 %v1049, %v1082
      %v1088 = vmul.f32 %v1054, %v1084
      %v1089 = vld [vmem:[%s8] sm:$0x7]
      %v1090 = vld [vmem:[%s9] sm:$0x7]
      %1092 = vset.pattern.permute.xlu0 0
      %1093 = vperm.xlu0 %1092, %v1090
      %v1094 = vpop.permute.xlu0 %1093
      %v1097 = vsel %vm710, %v1089, 0
      %1099 = vmatprep.subr.mxu0 0.0
      %1100 = vmatpush1.msra.mxu0 %v1057
      %1101 = vmatprep.subr.mxu0 0.0
      %1102 = vmatpush1.msra.mxu0 %v1058
      %1103 = vmatprep.subr.mxu0 0.0
      %1104 = vmatpush1.msra.mxu0 %v1059
      %1105 = vmatprep.subr.mxu0 0.0
      %1106 = vmatpush1.msra.mxu0 %v1060
      %1107 = vmatprep.subr.mxu0 0.0
      %1108 = vmatpush1.msra.mxu0 %v1085
      %1109 = vmatprep.subr.mxu0 0.0
      %1110 = vmatpush1.msra.mxu0 %v1086
      %1111 = vmatprep.subr.mxu0 0.0
      %1112 = vmatpush1.msra.mxu0 %v1087
      %1113 = vmatprep.subr.mxu0 0.0
      %1114 = vmatpush1.msra.mxu0 %v1088
      %1115 = vmatprep.subr.mxu0 0.0
      %1116 = vmatpush1.msra.mxu0 0.0
      %1117 = vmatprep.subr.mxu0 0.0
      %1118 = vmatpush1.msra.mxu0 0.0
      %1119 = vmatprep.subr.mxu0 0.0
      %1120 = vmatpush1.msra.mxu0 0.0
      %1121 = vmatprep.subr.mxu0 0.0
      %1122 = vmatpush1.msra.mxu0 0.0
      %1123 = vmatprep.subr.mxu0 0.0
      %1124 = vmatpush1.msra.mxu0 0.0
      %1125 = vmatprep.subr.mxu0 0.0
      %1126 = vmatpush1.msra.mxu0 0.0
      %1127 = vmatprep.subr.mxu0 0.0
      %1128 = vmatpush1.msra.mxu0 0.0
      %1129 = vmatprep.subr.mxu0 0.0
      %1130 = vmatpush1.msra.mxu0 0.0
      %1131 = vmatprep.subr.mxu0 0.0
      %1132 = vmatpush1.msra.mxu0 0.0
      %1133 = vmatprep.subr.mxu0 0.0
      %1134 = vmatpush1.msra.mxu0 0.0
      %1135 = vmatprep.subr.mxu0 0.0
      %1136 = vmatpush1.msra.mxu0 0.0
      %1137 = vmatprep.subr.mxu0 0.0
      %1138 = vmatpush1.msra.mxu0 0.0
      %1139 = vmatprep.subr.mxu0 0.0
      %1140 = vmatpush1.msra.mxu0 0.0
      %1141 = vmatprep.subr.mxu0 0.0
      %1142 = vmatpush1.msra.mxu0 0.0
      %1143 = vmatprep.subr.mxu0 0.0
      %1144 = vmatpush1.msra.mxu0 0.0
      %1145 = vmatprep.subr.mxu0 0.0
      %1146 = vmatpush1.msra.mxu0 0.0
      %1147 = vmatprep.subr.mxu0 0.0
      %1148 = vmatpush1.msra.mxu0 0.0
      %1149 = vmatprep.subr.mxu0 0.0
      %1150 = vmatpush1.msra.mxu0 0.0
      %1151 = vmatprep.subr.mxu0 0.0
      %1152 = vmatpush1.msra.mxu0 0.0
      %1153 = vmatprep.subr.mxu0 0.0
      %1154 = vmatpush1.msra.mxu0 0.0
      %1155 = vmatprep.subr.mxu0 0.0
      %1156 = vmatpush1.msra.mxu0 0.0
      %1157 = vmatprep.subr.mxu0 0.0
      %1158 = vmatpush1.msra.mxu0 0.0
      %1159 = vmatprep.subr.mxu0 0.0
      %1160 = vmatpush1.msra.mxu0 0.0
      %1161 = vmatprep.subr.mxu0 0.0
      %1162 = vmatpush1.msra.mxu0 0.0
      %1163 = vmatprep.mubr.f32.mxu0 0.0
      %1164 = vmatmul.mubr.f32.gmra.mrb[0].mxu0 %v1097
      %v1165 = vpop.f32.mrb[0].mxu0
      %v1166 = vadd.f32 %v1094, %v1165
      %v1167 = vpop.f32.mrb[0].mxu0
      %1168 = vdwg.mxu0
      %v1170 = vrot.slane %v1166, 7
      %v1172 = vsub.f32 %v437, %v1170
      %v1173 = vsub.f32 0.0, %v1166
      %v1174 = vmul.f32 %v1173, 1.442695
      %v1175 = vpow.pop %v1174
      %v1176 = vmul.f32 %v1172, %v1175
      %v1177 = vmul.f32 %v1176, %v1176
      %v1178 = vmul.f32 %v1177, 0.5
      %v1179 = vadd.f32 %v1178, %v1166
      %v1181 = vrot.slane %v1179, 6
      %vm1183 = vcmask 1042432
      %v1184 = vsel %vm1183, %v1166, %v1181
      %1185 = vst [vmem:[%s436] sm:$0xf] %v1184
      %p1186 = scmp.lt.s32.totalorder %s26, 1
      %s1187 = scalar_select %p1186, %s26, 1
      %p1188 = scmp.lt.s32.totalorder %s27, 1
      %s1189 = scalar_select %p1188, %s27, 1
      %p1190 = scmp.lt.s32.totalorder %s28, 0
      %s1191 = scalar_select %p1190, %s28, 0
      %s1192 = sadd.s32 %s1191, %s1189
      %s1193 = smul.addr %s1187, 2
      %s1194 = sadd.s32 %s1192, %s1193
      %s1195 = smul.addr %s1194, 4
      %s1196 = scalar_lea.vmem %s10, %s1195
      // Predicated region
      $region61: #{gaussian_decoder_forward.1} parent=59 // pred_check
        %p1197 = pneg %p286
      $region62: #{gaussian_decoder_forward.1} parent=59 // pred_check_branch
        %1199 = sbr.rel (%p1197) target = $region64
      $region63: #{gaussian_decoder_forward.1} parent=59 // pred_region
        _
      $region64: #{gaussian_decoder_forward.1} parent=59 // pred_fallthru
        _
    $region60: #{gaussian_decoder_forward.1} parent=5 // pred_fallthru
      _
    %p1200 = scmp.le.s32.totalorder 2, %s16
    // Predicated region
    $region65: #{gaussian_decoder_forward.1} parent=5 // pred_check
      %p1201 = pneg %p1200
    $region66: #{gaussian_decoder_forward.1} parent=5 // pred_check_branch
      %1203 = sbr.rel (%p1201) target = $region68
    $region67: #{gaussian_decoder_forward.1} parent=5 // pred_region
      %s1204 = ssub.s32 %s16, 2
      // Predicated region
      $region69: #{gaussian_decoder_forward.1} parent=67 // pred_check
        %p1205 = pneg %p292
      $region70: #{gaussian_decoder_forward.1} parent=67 // pred_check_branch
        %1207 = sbr.rel (%p1205) target = $region72
      $region71: #{gaussian_decoder_forward.1} parent=67 // pred_region
        %p1208 = scmp.lt.s32.totalorder %s29, 1
        %s1209 = scalar_select %p1208, %s29, 1
        %p1210 = scmp.lt.s32.totalorder %s30, 1
        %s1211 = scalar_select %p1210, %s30, 1
        %p1212 = scmp.lt.s32.totalorder %s31, 0
        %s1213 = scalar_select %p1212, %s31, 0
        %s1214 = sadd.s32 %s1213, %s1211
        %s1215 = smul.addr %s1209, 2
        %s1216 = sadd.s32 %s1214, %s1215
        %s1217 = smul.addr %s1216, 4
        %s1218 = scalar_lea.vmem %s10, %s1217
      $region72: #{gaussian_decoder_forward.1} parent=67 // pred_fallthru
        _
    $region68: #{gaussian_decoder_forward.1} parent=5 // pred_fallthru
      _
  $region6: #{gaussian_decoder_forward.1} parent=0 // loop_footer
    %s20 = sadd.s32 1, %s16
  $region7: #{gaussian_decoder_forward.1} parent=0 // loop_footer_branch
    %15 = sbr.rel target = $region3
  $region8: #{gaussian_decoder_forward.1} parent=0 // loop_exit
    _

</llo_original>
